<compile_context>
chip_gen: v7x
topology: tpu7x:2x2x1
jax: 0.10.0
libtpu: 0.0.40
codegen_flags: <defaults>
</compile_context>

<pallas_src>
import functools

import jax
import jax.numpy as jnp
from jax import lax
from jax.experimental import pallas as pl
from jax.experimental.pallas import tpu as pltpu


def _yolo_loss_kernel(y_pre_ref, y_true_ref, out_ref, acc_ref, *,
                      batch_size, grid_num, lambda_coord, lambda_noobj):
    step = pl.program_id(0)

    @pl.when(step == 0)
    def _():
        acc_ref[...] = jnp.zeros_like(acc_ref)

    eps = 1e-12
    pre = y_pre_ref[...].astype(jnp.float32)   # [30, T]  ((cx,cy,w,h,c)*2, class*20)
    tru = y_true_ref[...].astype(jnp.float32)  # [8,  T]  (class_id, cx,cy,w,h, fname, sw, sh)
    tile_n = pre.shape[1]

    cls_id = tru[0:1, :]                        # [1, T]
    has_obj = cls_id != 0.0                     # [1, T] bool

    # ground-truth box in "cell units"
    t_cx = tru[1:2, :]
    t_cy = tru[2:3, :]
    t_w = tru[3:4, :] * grid_num
    t_h = tru[4:5, :] * grid_num

    def _iou(box):                              # box: [4, T]
        p_cx = box[0:1, :]
        p_cy = box[1:2, :]
        p_w = box[2:3, :] * grid_num
        p_h = box[3:4, :] * grid_num
        ix = jnp.maximum(
            jnp.minimum(p_cx + 0.5 * p_w, t_cx + 0.5 * t_w)
            - jnp.maximum(p_cx - 0.5 * p_w, t_cx - 0.5 * t_w), 0.0)
        iy = jnp.maximum(
            jnp.minimum(p_cy + 0.5 * p_h, t_cy + 0.5 * t_h)
            - jnp.maximum(p_cy - 0.5 * p_h, t_cy - 0.5 * t_h), 0.0)
        inter = ix * iy
        union = p_w * p_h + t_w * t_h - inter
        # approximate reciprocal runs on the otherwise-idle EUP slot
        return inter * pl.reciprocal(jnp.maximum(union, eps), approx=True)

    iou0 = _iou(pre[0:4, :])                    # [1, T]
    iou1 = _iou(pre[5:9, :])                    # [1, T]

    # choose_bbox = 1 iff iou0 <= iou1 (reference picks 0 only when iou0 > iou1)
    pick1 = iou0 <= iou1                        # [1, T] bool

    # ---- confidence loss (object cells) ----
    conf_pre = jnp.where(pick1, pre[9:10, :], pre[4:5, :])
    conf_true = jnp.where(pick1, iou1, iou0)
    l_conf_obj = (conf_pre - conf_true) ** 2    # [1, T]

    # ---- coordinate (cx, cy) loss ----
    xy_pre = jnp.where(pick1, pre[5:7, :], pre[0:2, :])          # [2, T]
    l_coord = lambda_coord * jnp.sum(
        (xy_pre - tru[1:3, :]) ** 2, axis=0, keepdims=True)       # [1, T]

    # ---- scale (sqrt w, sqrt h) loss ----
    wh_pre = jnp.where(pick1, pre[7:9, :], pre[2:4, :])           # [2, T]
    l_scale = lambda_coord * jnp.sum(
        (jnp.sqrt(wh_pre + eps) - jnp.sqrt(tru[3:5, :] + eps)) ** 2,
        axis=0, keepdims=True)                                    # [1, T]

    # ---- classification loss ----
    cls_pre = pre[10:30, :]                                       # [20, T]
    cls_idx = cls_id.astype(jnp.int32) - 1                        # [1, T] (trunc, as int())
    row = lax.broadcasted_iota(jnp.int32, (20, tile_n), 0)        # sublane iota
    one_hot = (row == cls_idx).astype(jnp.float32)                # [20, T]
    l_class = jnp.sum((cls_pre - one_hot) ** 2, axis=0, keepdims=True)  # [1, T]

    # ---- no-object confidence loss ----
    l_noobj = lambda_noobj * (pre[4:5, :] ** 2 + pre[9:10, :] ** 2)

    per_cell = jnp.where(has_obj,
                         l_conf_obj + l_coord + l_scale + l_class,
                         l_noobj)                                 # [1, T]

    acc_ref[...] += jnp.sum(per_cell, keepdims=True)              # (1, 1)

    @pl.when(step == pl.num_programs(0) - 1)
    def _():
        out_ref[...] = acc_ref[...] / float(batch_size)


def yolo_v1_loss(y_pre, y_true, *, grid_num=7, img_size=448,
                 lambda_coord=5.0, lambda_noobj=0.5, target_tile=2048):
    """y_pre: [B, S, S, 30], y_true: [B, S, S, 8] -> scalar loss, shape (1,)."""
    del img_size  # cancels out of the IoU ratio (see note at top of file)
    b, s0, s1, c = y_pre.shape
    assert s0 == grid_num and s1 == grid_num and c == 30
    assert y_true.shape == (b, grid_num, grid_num, 8)

    n = b * grid_num * grid_num

    # Channel-major layout: cells on the lane axis.
    pre = y_pre.reshape(n, 30).T          # [30, N]  (kept in input dtype; cast in-kernel)
    tru = y_true.reshape(n, 8).T          # [8,  N]

    # Pick a 128-multiple lane tile and zero-pad N so the lane axis is dense
    # and the grid divides evenly (padding is loss-neutral: class_id=0, conf=0).
    if n <= target_tile:
        tile = ((n + 127) // 128) * 128
        n_pad = tile
    else:
        tile = target_tile
        n_pad = ((n + tile - 1) // tile) * tile
    if n_pad != n:
        pre = jnp.pad(pre, ((0, 0), (0, n_pad - n)))
        tru = jnp.pad(tru, ((0, 0), (0, n_pad - n)))

    kernel = functools.partial(
        _yolo_loss_kernel,
        batch_size=b, grid_num=grid_num,
        lambda_coord=lambda_coord, lambda_noobj=lambda_noobj)

    out = pl.pallas_call(
        kernel,
        out_shape=jax.ShapeDtypeStruct((1, 1), jnp.float32),
        grid=(n_pad // tile,),
        in_specs=[
            pl.BlockSpec((30, tile), lambda i: (0, i)),
            pl.BlockSpec((8, tile), lambda i: (0, i)),
        ],
        out_specs=pl.BlockSpec((1, 1), lambda i: (0, 0)),
        scratch_shapes=[pltpu.VMEM((1, 1), jnp.float32)],
        compiler_params=pltpu.CompilerParams(
            dimension_semantics=("arbitrary",)),
    )(pre, tru)
    return out.reshape((1,))  # same shape as the torch return ([1])


if __name__ == "__main__":
    key = jax.random.PRNGKey(0)
    k_pre, k_cls, k_box, k_misc = jax.random.split(key, 4)

    B, S = 2, 7  # grid_num = 7 as in the module default

    # Predictions: uniform in (0, 1) so w, h are valid (sqrt stays real).
    y_pre = jax.random.uniform(k_pre, (B, S, S, 30), dtype=jnp.float32)

    # Ground truth: class_id in {0..20} (0 => no object), boxes in (0.1, 0.9).
    cls = jax.random.randint(k_cls, (B, S, S, 1), 0, 21).astype(jnp.float32)
    box = jax.random.uniform(k_box, (B, S, S, 4), dtype=jnp.float32,
                             minval=0.1, maxval=0.9)
    misc = jax.random.uniform(k_misc, (B, S, S, 3), dtype=jnp.float32)
    y_true = jnp.concatenate([cls, box, misc], axis=-1)

    loss = yolo_v1_loss(y_pre, y_true, grid_num=S, img_size=448,
                        lambda_coord=5.0, lambda_noobj=0.5)
    loss = jax.block_until_ready(loss)
    assert loss.shape == (1,) and bool(jnp.isfinite(loss[0]))
    print("KERNEL_OK")
</pallas_src>

<mosaic_0001>
module attributes {stable_mosaic.version = 11 : i64} {
  func.func @_yolo_loss_kernel(%arg0: i32, %arg1: memref<30x128xf32, #tpu.memory_space<vmem>>, %arg2: memref<8x128xf32, #tpu.memory_space<vmem>>, %arg3: memref<1x1xf32, #tpu.memory_space<vmem>>, %arg4: memref<1x1xf32, #tpu.memory_space<vmem>>) attributes {dimension_semantics = [#tpu.dimension_semantics<arbitrary>], iteration_bounds = array<i64: 1>, scalar_prefetch = 0 : i64, scratch_operands = 1 : i64, tpu.core_type = #tpu.core_type<tc>, window_params = [{transform_indices = @transform_0, window_bounds = array<i64: 30, 128>}, {transform_indices = @transform_1, window_bounds = array<i64: 8, 128>}, {pipeline_mode = #tpu.pipeline_mode<synchronous>, transform_indices = @transform_2, window_bounds = array<i64: 1, 1>}]} {
    %c0_i32 = arith.constant 0 : i32
    %0 = arith.cmpi eq, %arg0, %c0_i32 : i32
    %1 = arith.extui %0 : i1 to i32
    %c0_i32_0 = arith.constant 0 : i32
    %2 = arith.cmpi ne, %1, %c0_i32_0 : i32
    scf.if %2 {
      %cst_47 = arith.constant 0.000000e+00 : f32
      %192 = vector.broadcast %cst_47 : f32 to vector<1x1xf32>
      %c0_48 = arith.constant 0 : index
      %c0_49 = arith.constant 0 : index
      %193 = vector.load %arg4[%c0_48, %c0_49] : memref<1x1xf32, #tpu.memory_space<vmem>>, vector<1x1xf32>
      tpu.vector_store %arg4[%c0_48, %c0_49], %192 {strides = array<i32>} : memref<1x1xf32, #tpu.memory_space<vmem>>, vector<1x1xf32>,
    } else {
    }
    %c0 = arith.constant 0 : index
    %c0_1 = arith.constant 0 : index
    %3 = vector.load %arg1[%c0, %c0_1] : memref<30x128xf32, #tpu.memory_space<vmem>>, vector<30x128xf32>
    %c0_2 = arith.constant 0 : index
    %c0_3 = arith.constant 0 : index
    %4 = vector.load %arg2[%c0_2, %c0_3] : memref<8x128xf32, #tpu.memory_space<vmem>>, vector<8x128xf32>
    %5 = vector.extract_strided_slice %4 {offsets = [0, 0], sizes = [1, 128], strides = [1, 1]} : vector<8x128xf32> to vector<1x128xf32>
    %cst = arith.constant 0.000000e+00 : f32
    %6 = vector.broadcast %cst : f32 to vector<1x128xf32>
    %7 = arith.cmpf one, %5, %6 : vector<1x128xf32>
    %8 = vector.extract_strided_slice %4 {offsets = [1, 0], sizes = [1, 128], strides = [1, 1]} : vector<8x128xf32> to vector<1x128xf32>
    %9 = vector.extract_strided_slice %4 {offsets = [2, 0], sizes = [1, 128], strides = [1, 1]} : vector<8x128xf32> to vector<1x128xf32>
    %10 = vector.extract_strided_slice %4 {offsets = [3, 0], sizes = [1, 128], strides = [1, 1]} : vector<8x128xf32> to vector<1x128xf32>
    %cst_4 = arith.constant 7.000000e+00 : f32
    %11 = vector.broadcast %cst_4 : f32 to vector<1x128xf32>
    %12 = arith.mulf %10, %11 : vector<1x128xf32>
    %13 = vector.extract_strided_slice %4 {offsets = [4, 0], sizes = [1, 128], strides = [1, 1]} : vector<8x128xf32> to vector<1x128xf32>
    %cst_5 = arith.constant 7.000000e+00 : f32
    %14 = vector.broadcast %cst_5 : f32 to vector<1x128xf32>
    %15 = arith.mulf %13, %14 : vector<1x128xf32>
    %16 = vector.extract_strided_slice %3 {offsets = [0, 0], sizes = [4, 128], strides = [1, 1]} : vector<30x128xf32> to vector<4x128xf32>
    %17 = vector.extract_strided_slice %16 {offsets = [0, 0], sizes = [1, 128], strides = [1, 1]} : vector<4x128xf32> to vector<1x128xf32>
    %18 = vector.extract_strided_slice %16 {offsets = [1, 0], sizes = [1, 128], strides = [1, 1]} : vector<4x128xf32> to vector<1x128xf32>
    %19 = vector.extract_strided_slice %16 {offsets = [2, 0], sizes = [1, 128], strides = [1, 1]} : vector<4x128xf32> to vector<1x128xf32>
    %cst_6 = arith.constant 7.000000e+00 : f32
    %20 = vector.broadcast %cst_6 : f32 to vector<1x128xf32>
    %21 = arith.mulf %19, %20 : vector<1x128xf32>
    %22 = vector.extract_strided_slice %16 {offsets = [3, 0], sizes = [1, 128], strides = [1, 1]} : vector<4x128xf32> to vector<1x128xf32>
    %cst_7 = arith.constant 7.000000e+00 : f32
    %23 = vector.broadcast %cst_7 : f32 to vector<1x128xf32>
    %24 = arith.mulf %22, %23 : vector<1x128xf32>
    %cst_8 = arith.constant 5.000000e-01 : f32
    %25 = vector.broadcast %cst_8 : f32 to vector<1x128xf32>
    %26 = arith.mulf %25, %21 : vector<1x128xf32>
    %27 = arith.addf %17, %26 : vector<1x128xf32>
    %cst_9 = arith.constant 5.000000e-01 : f32
    %28 = vector.broadcast %cst_9 : f32 to vector<1x128xf32>
    %29 = arith.mulf %28, %12 : vector<1x128xf32>
    %30 = arith.addf %8, %29 : vector<1x128xf32>
    %31 = arith.minimumf %27, %30 : vector<1x128xf32>
    %cst_10 = arith.constant 5.000000e-01 : f32
    %32 = vector.broadcast %cst_10 : f32 to vector<1x128xf32>
    %33 = arith.mulf %32, %21 : vector<1x128xf32>
    %34 = arith.subf %17, %33 : vector<1x128xf32>
    %cst_11 = arith.constant 5.000000e-01 : f32
    %35 = vector.broadcast %cst_11 : f32 to vector<1x128xf32>
    %36 = arith.mulf %35, %12 : vector<1x128xf32>
    %37 = arith.subf %8, %36 : vector<1x128xf32>
    %38 = arith.maximumf %34, %37 : vector<1x128xf32>
    %39 = arith.subf %31, %38 : vector<1x128xf32>
    %cst_12 = arith.constant 0.000000e+00 : f32
    %40 = vector.broadcast %cst_12 : f32 to vector<1x128xf32>
    %41 = arith.maximumf %39, %40 : vector<1x128xf32>
    %cst_13 = arith.constant 5.000000e-01 : f32
    %42 = vector.broadcast %cst_13 : f32 to vector<1x128xf32>
    %43 = arith.mulf %42, %24 : vector<1x128xf32>
    %44 = arith.addf %18, %43 : vector<1x128xf32>
    %cst_14 = arith.constant 5.000000e-01 : f32
    %45 = vector.broadcast %cst_14 : f32 to vector<1x128xf32>
    %46 = arith.mulf %45, %15 : vector<1x128xf32>
    %47 = arith.addf %9, %46 : vector<1x128xf32>
    %48 = arith.minimumf %44, %47 : vector<1x128xf32>
    %cst_15 = arith.constant 5.000000e-01 : f32
    %49 = vector.broadcast %cst_15 : f32 to vector<1x128xf32>
    %50 = arith.mulf %49, %24 : vector<1x128xf32>
    %51 = arith.subf %18, %50 : vector<1x128xf32>
    %cst_16 = arith.constant 5.000000e-01 : f32
    %52 = vector.broadcast %cst_16 : f32 to vector<1x128xf32>
    %53 = arith.mulf %52, %15 : vector<1x128xf32>
    %54 = arith.subf %9, %53 : vector<1x128xf32>
    %55 = arith.maximumf %51, %54 : vector<1x128xf32>
    %56 = arith.subf %48, %55 : vector<1x128xf32>
    %cst_17 = arith.constant 0.000000e+00 : f32
    %57 = vector.broadcast %cst_17 : f32 to vector<1x128xf32>
    %58 = arith.maximumf %56, %57 : vector<1x128xf32>
    %59 = arith.mulf %41, %58 : vector<1x128xf32>
    %60 = arith.mulf %21, %24 : vector<1x128xf32>
    %61 = arith.mulf %12, %15 : vector<1x128xf32>
    %62 = arith.addf %60, %61 : vector<1x128xf32>
    %63 = arith.subf %62, %59 : vector<1x128xf32>
    %cst_18 = arith.constant 9.99999996E-13 : f32
    %64 = vector.broadcast %cst_18 : f32 to vector<1x128xf32>
    %65 = arith.maximumf %63, %64 : vector<1x128xf32>
    %66 = tpu.reciprocal %65 {approx = true} : vector<1x128xf32> -> vector<1x128xf32>
    %67 = arith.mulf %59, %66 : vector<1x128xf32>
    %68 = vector.extract_strided_slice %3 {offsets = [5, 0], sizes = [4, 128], strides = [1, 1]} : vector<30x128xf32> to vector<4x128xf32>
    %69 = vector.extract_strided_slice %68 {offsets = [0, 0], sizes = [1, 128], strides = [1, 1]} : vector<4x128xf32> to vector<1x128xf32>
    %70 = vector.extract_strided_slice %68 {offsets = [1, 0], sizes = [1, 128], strides = [1, 1]} : vector<4x128xf32> to vector<1x128xf32>
    %71 = vector.extract_strided_slice %68 {offsets = [2, 0], sizes = [1, 128], strides = [1, 1]} : vector<4x128xf32> to vector<1x128xf32>
    %cst_19 = arith.constant 7.000000e+00 : f32
    %72 = vector.broadcast %cst_19 : f32 to vector<1x128xf32>
    %73 = arith.mulf %71, %72 : vector<1x128xf32>
    %74 = vector.extract_strided_slice %68 {offsets = [3, 0], sizes = [1, 128], strides = [1, 1]} : vector<4x128xf32> to vector<1x128xf32>
    %cst_20 = arith.constant 7.000000e+00 : f32
    %75 = vector.broadcast %cst_20 : f32 to vector<1x128xf32>
    %76 = arith.mulf %74, %75 : vector<1x128xf32>
    %cst_21 = arith.constant 5.000000e-01 : f32
    %77 = vector.broadcast %cst_21 : f32 to vector<1x128xf32>
    %78 = arith.mulf %77, %73 : vector<1x128xf32>
    %79 = arith.addf %69, %78 : vector<1x128xf32>
    %cst_22 = arith.constant 5.000000e-01 : f32
    %80 = vector.broadcast %cst_22 : f32 to vector<1x128xf32>
    %81 = arith.mulf %80, %12 : vector<1x128xf32>
    %82 = arith.addf %8, %81 : vector<1x128xf32>
    %83 = arith.minimumf %79, %82 : vector<1x128xf32>
    %cst_23 = arith.constant 5.000000e-01 : f32
    %84 = vector.broadcast %cst_23 : f32 to vector<1x128xf32>
    %85 = arith.mulf %84, %73 : vector<1x128xf32>
    %86 = arith.subf %69, %85 : vector<1x128xf32>
    %cst_24 = arith.constant 5.000000e-01 : f32
    %87 = vector.broadcast %cst_24 : f32 to vector<1x128xf32>
    %88 = arith.mulf %87, %12 : vector<1x128xf32>
    %89 = arith.subf %8, %88 : vector<1x128xf32>
    %90 = arith.maximumf %86, %89 : vector<1x128xf32>
    %91 = arith.subf %83, %90 : vector<1x128xf32>
    %cst_25 = arith.constant 0.000000e+00 : f32
    %92 = vector.broadcast %cst_25 : f32 to vector<1x128xf32>
    %93 = arith.maximumf %91, %92 : vector<1x128xf32>
    %cst_26 = arith.constant 5.000000e-01 : f32
    %94 = vector.broadcast %cst_26 : f32 to vector<1x128xf32>
    %95 = arith.mulf %94, %76 : vector<1x128xf32>
    %96 = arith.addf %70, %95 : vector<1x128xf32>
    %cst_27 = arith.constant 5.000000e-01 : f32
    %97 = vector.broadcast %cst_27 : f32 to vector<1x128xf32>
    %98 = arith.mulf %97, %15 : vector<1x128xf32>
    %99 = arith.addf %9, %98 : vector<1x128xf32>
    %100 = arith.minimumf %96, %99 : vector<1x128xf32>
    %cst_28 = arith.constant 5.000000e-01 : f32
    %101 = vector.broadcast %cst_28 : f32 to vector<1x128xf32>
    %102 = arith.mulf %101, %76 : vector<1x128xf32>
    %103 = arith.subf %70, %102 : vector<1x128xf32>
    %cst_29 = arith.constant 5.000000e-01 : f32
    %104 = vector.broadcast %cst_29 : f32 to vector<1x128xf32>
    %105 = arith.mulf %104, %15 : vector<1x128xf32>
    %106 = arith.subf %9, %105 : vector<1x128xf32>
    %107 = arith.maximumf %103, %106 : vector<1x128xf32>
    %108 = arith.subf %100, %107 : vector<1x128xf32>
    %cst_30 = arith.constant 0.000000e+00 : f32
    %109 = vector.broadcast %cst_30 : f32 to vector<1x128xf32>
    %110 = arith.maximumf %108, %109 : vector<1x128xf32>
    %111 = arith.mulf %93, %110 : vector<1x128xf32>
    %112 = arith.mulf %73, %76 : vector<1x128xf32>
    %113 = arith.mulf %12, %15 : vector<1x128xf32>
    %114 = arith.addf %112, %113 : vector<1x128xf32>
    %115 = arith.subf %114, %111 : vector<1x128xf32>
    %cst_31 = arith.constant 9.99999996E-13 : f32
    %116 = vector.broadcast %cst_31 : f32 to vector<1x128xf32>
    %117 = arith.maximumf %115, %116 : vector<1x128xf32>
    %118 = tpu.reciprocal %117 {approx = true} : vector<1x128xf32> -> vector<1x128xf32>
    %119 = arith.mulf %111, %118 : vector<1x128xf32>
    %120 = arith.cmpf ole, %67, %119 : vector<1x128xf32>
    %121 = vector.extract_strided_slice %3 {offsets = [9, 0], sizes = [1, 128], strides = [1, 1]} : vector<30x128xf32> to vector<1x128xf32>
    %122 = vector.extract_strided_slice %3 {offsets = [4, 0], sizes = [1, 128], strides = [1, 1]} : vector<30x128xf32> to vector<1x128xf32>
    %123 = arith.select %120, %121, %122 : vector<1x128xi1>, vector<1x128xf32>
    %124 = arith.select %120, %119, %67 : vector<1x128xi1>, vector<1x128xf32>
    %125 = arith.subf %123, %124 : vector<1x128xf32>
    %126 = arith.mulf %125, %125 : vector<1x128xf32>
    %127 = vector.extract_strided_slice %3 {offsets = [5, 0], sizes = [2, 128], strides = [1, 1]} : vector<30x128xf32> to vector<2x128xf32>
    %128 = vector.extract_strided_slice %3 {offsets = [0, 0], sizes = [2, 128], strides = [1, 1]} : vector<30x128xf32> to vector<2x128xf32>
    %129 = vector.shape_cast %120 : vector<1x128xi1> to vector<1x128xi1>
    %130 = vector.broadcast %129 : vector<1x128xi1> to vector<2x128xi1>
    %131 = arith.select %130, %127, %128 : vector<2x128xi1>, vector<2x128xf32>
    %132 = vector.extract_strided_slice %4 {offsets = [1, 0], sizes = [2, 128], strides = [1, 1]} : vector<8x128xf32> to vector<2x128xf32>
    %133 = arith.subf %131, %132 : vector<2x128xf32>
    %134 = arith.mulf %133, %133 : vector<2x128xf32>
    %cst_32 = arith.constant dense<0.000000e+00> : vector<128xf32>
    %135 = vector.multi_reduction <add>, %134, %cst_32 [0] : vector<2x128xf32> to vector<128xf32>
    %136 = vector.shape_cast %135 : vector<128xf32> to vector<1x128xf32>
    %cst_33 = arith.constant 5.000000e+00 : f32
    %137 = vector.broadcast %cst_33 : f32 to vector<1x128xf32>
    %138 = arith.mulf %137, %136 : vector<1x128xf32>
    %139 = vector.extract_strided_slice %3 {offsets = [7, 0], sizes = [2, 128], strides = [1, 1]} : vector<30x128xf32> to vector<2x128xf32>
    %140 = vector.extract_strided_slice %3 {offsets = [2, 0], sizes = [2, 128], strides = [1, 1]} : vector<30x128xf32> to vector<2x128xf32>
    %141 = vector.shape_cast %120 : vector<1x128xi1> to vector<1x128xi1>
    %142 = vector.broadcast %141 : vector<1x128xi1> to vector<2x128xi1>
    %143 = arith.select %142, %139, %140 : vector<2x128xi1>, vector<2x128xf32>
    %cst_34 = arith.constant 9.99999996E-13 : f32
    %144 = vector.broadcast %cst_34 : f32 to vector<2x128xf32>
    %145 = arith.addf %143, %144 : vector<2x128xf32>
    %146 = math.sqrt %145 : vector<2x128xf32>
    %147 = vector.extract_strided_slice %4 {offsets = [3, 0], sizes = [2, 128], strides = [1, 1]} : vector<8x128xf32> to vector<2x128xf32>
    %cst_35 = arith.constant 9.99999996E-13 : f32
    %148 = vector.broadcast %cst_35 : f32 to vector<2x128xf32>
    %149 = arith.addf %147, %148 : vector<2x128xf32>
    %150 = math.sqrt %149 : vector<2x128xf32>
    %151 = arith.subf %146, %150 : vector<2x128xf32>
    %152 = arith.mulf %151, %151 : vector<2x128xf32>
    %cst_36 = arith.constant dense<0.000000e+00> : vector<128xf32>
    %153 = vector.multi_reduction <add>, %152, %cst_36 [0] : vector<2x128xf32> to vector<128xf32>
    %154 = vector.shape_cast %153 : vector<128xf32> to vector<1x128xf32>
    %cst_37 = arith.constant 5.000000e+00 : f32
    %155 = vector.broadcast %cst_37 : f32 to vector<1x128xf32>
    %156 = arith.mulf %155, %154 : vector<1x128xf32>
    %157 = vector.extract_strided_slice %3 {offsets = [10, 0], sizes = [20, 128], strides = [1, 1]} : vector<30x128xf32> to vector<20x128xf32>
    %158 = arith.fptosi %5 : vector<1x128xf32> to vector<1x128xi32>
    %c1_i32 = arith.constant 1 : i32
    %159 = vector.broadcast %c1_i32 : i32 to vector<1x128xi32>
    %160 = arith.subi %158, %159 : vector<1x128xi32>
    %161 = tpu.iota {dimensions = array<i32: 0>} : vector<20x128xi32>
    %162 = vector.broadcast %160 : vector<1x128xi32> to vector<20x128xi32>
    %163 = arith.cmpi eq, %161, %162 : vector<20x128xi32>
    %164 = arith.extui %163 : vector<20x128xi1> to vector<20x128xi32>
    %165 = arith.sitofp %164 : vector<20x128xi32> to vector<20x128xf32>
    %166 = arith.subf %157, %165 : vector<20x128xf32>
    %167 = arith.mulf %166, %166 : vector<20x128xf32>
    %cst_38 = arith.constant dense<0.000000e+00> : vector<128xf32>
    %168 = vector.multi_reduction <add>, %167, %cst_38 [0] : vector<20x128xf32> to vector<128xf32>
    %169 = vector.shape_cast %168 : vector<128xf32> to vector<1x128xf32>
    %170 = vector.extract_strided_slice %3 {offsets = [4, 0], sizes = [1, 128], strides = [1, 1]} : vector<30x128xf32> to vector<1x128xf32>
    %171 = arith.mulf %170, %170 : vector<1x128xf32>
    %172 = vector.extract_strided_slice %3 {offsets = [9, 0], sizes = [1, 128], strides = [1, 1]} : vector<30x128xf32> to vector<1x128xf32>
    %173 = arith.mulf %172, %172 : vector<1x128xf32>
    %174 = arith.addf %171, %173 : vector<1x128xf32>
    %cst_39 = arith.constant 5.000000e-01 : f32
    %175 = vector.broadcast %cst_39 : f32 to vector<1x128xf32>
    %176 = arith.mulf %175, %174 : vector<1x128xf32>
    %177 = arith.addf %126, %138 : vector<1x128xf32>
    %178 = arith.addf %177, %156 : vector<1x128xf32>
    %179 = arith.addf %178, %169 : vector<1x128xf32>
    %180 = arith.select %7, %179, %176 : vector<1x128xi1>, vector<1x128xf32>
    %c0_40 = arith.constant 0 : index
    %c0_41 = arith.constant 0 : index
    %181 = vector.load %arg4[%c0_40, %c0_41] : memref<1x1xf32, #tpu.memory_space<vmem>>, vector<1x1xf32>
    %182 = vector.shape_cast %180 : vector<1x128xf32> to vector<1x1x128xf32>
    %cst_42 = arith.constant dense<0.000000e+00> : vector<1xf32>
    %183 = vector.multi_reduction <add>, %182, %cst_42 [1, 2] : vector<1x1x128xf32> to vector<1xf32>
    %184 = vector.shape_cast %183 : vector<1xf32> to vector<1x1x1xf32>
    %185 = vector.extract %184[0, 0, 0] : f32 from vector<1x1x1xf32>
    %186 = vector.broadcast %185 : f32 to vector<1x1xf32>
    %187 = arith.addf %181, %186 : vector<1x1xf32>
    %c0_43 = arith.constant 0 : index
    %c0_44 = arith.constant 0 : index
    %188 = vector.load %arg4[%c0_43, %c0_44] : memref<1x1xf32, #tpu.memory_space<vmem>>, vector<1x1xf32>
    tpu.vector_store %arg4[%c0_43, %c0_44], %187 {strides = array<i32>} : memref<1x1xf32, #tpu.memory_space<vmem>>, vector<1x1xf32>,
    %c0_i32_45 = arith.constant 0 : i32
    %189 = arith.cmpi eq, %arg0, %c0_i32_45 : i32
    %190 = arith.extui %189 : i1 to i32
    %c0_i32_46 = arith.constant 0 : i32
    %191 = arith.cmpi ne, %190, %c0_i32_46 : i32
    scf.if %191 {
      %c0_47 = arith.constant 0 : index
      %c0_48 = arith.constant 0 : index
      %192 = vector.load %arg4[%c0_47, %c0_48] : memref<1x1xf32, #tpu.memory_space<vmem>>, vector<1x1xf32>
      %cst_49 = arith.constant 2.000000e+00 : f32
      %193 = vector.broadcast %cst_49 : f32 to vector<1x1xf32>
      %194 = arith.divf %192, %193 : vector<1x1xf32>
      %c0_50 = arith.constant 0 : index
      %c0_51 = arith.constant 0 : index
      %195 = vector.load %arg3[%c0_50, %c0_51] : memref<1x1xf32, #tpu.memory_space<vmem>>, vector<1x1xf32>
      tpu.vector_store %arg3[%c0_50, %c0_51], %194 {strides = array<i32>} : memref<1x1xf32, #tpu.memory_space<vmem>>, vector<1x1xf32>,
    } else {
    }
    return
  }
  func.func @transform_0(%arg0: i32) -> (i32, i32) {
    %c0_i32 = arith.constant 0 : i32
    %c0_i32_0 = arith.constant 0 : i32
    return %c0_i32, %arg0 : i32, i32
  }
  func.func @transform_1(%arg0: i32) -> (i32, i32) {
    %c0_i32 = arith.constant 0 : i32
    %c0_i32_0 = arith.constant 0 : i32
    return %c0_i32, %arg0 : i32, i32
  }
  func.func @transform_2(%arg0: i32) -> (i32, i32) {
    %c0_i32 = arith.constant 0 : i32
    %c0_i32_0 = arith.constant 0 : i32
    %c0_i32_1 = arith.constant 0 : i32
    return %c0_i32, %c0_i32_0 : i32, i32
  }
}

</mosaic_0001>

<llo_original>
// kernel: tpu_custom_call.1
$region0: #{tpu_custom_call.1}
  #allocation0 [shape = 'u32[]', space=smem, size = 0x4, offset = 0x4, fixed_abs, tag = 'smem constant byte address 0x4 - core index']
  #allocation1 [shape = 'u32[144,128]{1,0:T(1,128)}', space=vmem, size = 0x12000, scoped, tag = 'internal scratch']
  #allocation2 [shape = 'f32[1,1]{1,0:T(1,128)}', space=vmem, size = 0x200, scoped, tag = 'scratch operand']
  %s0 = inlined_call_operand.hbm [shape: f32[30,128], index: 0, kind: input, shape index: {}]
  %s1 = inlined_call_operand.hbm [shape: f32[8,128], index: 1, kind: input, shape index: {}]
  %s2 = inlined_call_operand.hbm [shape: f32[1,1], index: 2, kind: output, shape index: {}]
  %s3 = sld [smem:[#allocation0]]
  $region34: #{tpu_custom_call.1} parent=0
    _
  %s5 = ssub.s32 1, %s3
  %s6 = scalar_select 0, %s5, %s3
  $region1: #{tpu_custom_call.1} parent=0
    #allocation3 [shape = 'u8[16384]{0}', space=vmem, size = 0x4000, scoped, tag = 'input window, operand 0, single buffered']
    #allocation4 [shape = 's32[1]{0}', space=sflag, size = 0x4, scoped, tag = 'scoped memory for tpu_custom_call.1']
    #allocation5 [shape = 's32[1]{0}', space=sflag, size = 0x4, scoped, tag = 'scoped memory for tpu_custom_call.1']
    #allocation6 [shape = 'u8[4096]{0}', space=vmem, size = 0x1000, scoped, tag = 'input window, operand 1, single buffered']
    #allocation7 [shape = 's32[1]{0}', space=sflag, size = 0x4, scoped, tag = 'scoped memory for tpu_custom_call.1']
    #allocation8 [shape = 'u8[512]{0}', space=vmem, size = 0x400, scoped, tag = 'output window, operand 0, single buffered']
    %7 = vsyncpa [#allocation4], 0
    %8 = vsyncpa [#allocation7], 0
    %9 = vsyncpa [#allocation5], 0
    // Predicated region
    $region2: #{tpu_custom_call.1} parent=1 // pred_check
      _
    $region3: #{tpu_custom_call.1} parent=1 // pred_check_branch
      %11 = sbr.rel (0) target = $region5
    $region4: #{tpu_custom_call.1} parent=1 // pred_region
      %s13 = ssub.s32 512, 512
      %14 = vsyncadd [#allocation4], %s13
      %s15 = sshll.u32 [#allocation3], 4
      %s16 = int_to_ptr.vmem [resolvable:$true] %s15
      %21 = dma.hbm_to_vmem [thread:$0]  %s0, 512, %s16, [#allocation4], 128, 128, 8
    $region5: #{tpu_custom_call.1} parent=1 // pred_fallthru
      _
    // Predicated region
    $region6: #{tpu_custom_call.1} parent=1 // pred_check
      _
    $region7: #{tpu_custom_call.1} parent=1 // pred_check_branch
      %23 = sbr.rel (0) target = $region9
    $region8: #{tpu_custom_call.1} parent=1 // pred_region
      %s25 = ssub.s32 128, 128
      %26 = vsyncadd [#allocation7], %s25
      %s28 = sshll.u32 [#allocation6], 4
      %s29 = int_to_ptr.vmem [resolvable:$true] %s28
      %31 = dma.hbm_to_vmem [thread:$0]  %s1, 128, %s29, [#allocation7]
    $region9: #{tpu_custom_call.1} parent=1 // pred_fallthru
      _
    // Predicated region
    $region10: #{tpu_custom_call.1} parent=1 // pred_check
      _
    $region11: #{tpu_custom_call.1} parent=1 // pred_check_branch
      %33 = sbr.rel (0) target = $region13
    $region12: #{tpu_custom_call.1} parent=1 // pred_region
      %34 = dma.done [#allocation4], 512
    $region13: #{tpu_custom_call.1} parent=1 // pred_fallthru
      _
    // Predicated region
    $region14: #{tpu_custom_call.1} parent=1 // pred_check
      _
    $region15: #{tpu_custom_call.1} parent=1 // pred_check_branch
      %36 = sbr.rel (0) target = $region17
    $region16: #{tpu_custom_call.1} parent=1 // pred_region
      %37 = dma.done [#allocation7], 128
    $region17: #{tpu_custom_call.1} parent=1 // pred_fallthru
      _
    %p38 = scmp.eq.s32.totalorder 0, 0
    // Predicated region
    $region18: #{tpu_custom_call.1} parent=1 // pred_check
      %p39 = pneg %p38
    $region19: #{tpu_custom_call.1} parent=1 // pred_check_branch
      %41 = sbr.rel (%p39) target = $region21
    $region20: #{tpu_custom_call.1} parent=1 // pred_region
      %vm42 = vcmask 0
      %43 = vst.msk [vmem:[#allocation2] sm:$0x1] %vm42, 0.0
    $region21: #{tpu_custom_call.1} parent=1 // pred_fallthru
      _
    %v44 = vld [vmem:[#allocation3] sm:$0xff]
    %v45 = vld [vmem:[#allocation3 + $0x8] sm:$0xff]
    %v46 = vld [vmem:[#allocation3 + $0x10] sm:$0xff]
    %v47 = vld [vmem:[#allocation3 + $0x18] sm:$0x3f]
    %v48 = vld [vmem:[#allocation6] sm:$0xff]
    %vm49 = vcmp.ne.f32.partialorder %v48, 0.0
    %v50 = vmul.f32 %v48, 7.0
    %v51 = vmul.f32 %v44, 7.0
    %v52 = vmul.f32 %v51, 0.5
    %v54 = vrot.slane %v52, 2
    %v56 = vadd.f32 %v44, %v54
    %v57 = vmul.f32 %v50, 0.5
    %v59 = vrot.slane %v57, 2
    %v61 = vadd.f32 %v48, %v59
    %v63 = vrot.slane %v61, 1
    %v65 = vmin.f32 %v56, %v63
    %v66 = vsub.f32 %v44, %v54
    %v67 = vsub.f32 %v48, %v59
    %v69 = vrot.slane %v67, 1
    %v71 = vmax.f32 %v66, %v69
    %v72 = vsub.f32 %v65, %v71
    %v73 = vmax.f32 %v72, 0.0
    %v75 = vrot.slane %v73, 1
    %v77 = vmul.f32 %v73, %v75
    %v79 = vrot.slane %v51, 1
    %v81 = vmul.f32 %v51, %v79
    %v83 = vrot.slane %v50, 1
    %v85 = vmul.f32 %v50, %v83
    %v87 = vrot.slane %v85, 1
    %v89 = vadd.f32 %v81, %v87
    %v91 = vrot.slane %v77, 6
    %v93 = vsub.f32 %v89, %v91
    %v94 = vmax.f32 %v93, 1e-12
    %v95 = vrcp.pop %v94
    %v97 = vrot.slane %v95, 2
    %v99 = vmul.f32 %v77, %v97
    %v100 = vmul.f32 %v45, 7.0
    %v101 = vrot.slane %v61, 4
    %v103 = vmin.f32 %v56, %v101
    %v104 = vrot.slane %v67, 4
    %v106 = vmax.f32 %v66, %v104
    %v107 = vsub.f32 %v103, %v106
    %v108 = vmax.f32 %v107, 0.0
    %v109 = vmul.f32 %v100, 0.5
    %v111 = vrot.slane %v109, 2
    %v113 = vadd.f32 %v44, %v111
    %v114 = vmin.f32 %v113, %v101
    %v115 = vsub.f32 %v44, %v111
    %v116 = vmax.f32 %v115, %v104
    %v117 = vsub.f32 %v114, %v116
    %v118 = vmax.f32 %v117, 0.0
    %v120 = vrot.slane %v118, 1
    %v122 = vmul.f32 %v108, %v120
    %v124 = vrot.slane %v100, 1
    %v126 = vmul.f32 %v51, %v124
    %v127 = vrot.slane %v85, 4
    %v129 = vadd.f32 %v126, %v127
    %v131 = vrot.slane %v122, 6
    %v133 = vsub.f32 %v129, %v131
    %v134 = vmax.f32 %v133, 1e-12
    %v135 = vrcp.pop %v134
    %v137 = vrot.slane %v135, 2
    %v139 = vmul.f32 %v122, %v137
    %v141 = vrot.slane %v139, 5
    %vm143 = vcmp.le.f32.partialorder %v99, %v141
    %v145 = vrot.slane %v45, 1
    %v148 = vrot.slane %v44, 4
    %v150 = vsel %vm143, %v145, %v148
    %v151 = vsel %vm143, %v141, %v99
    %v152 = vsub.f32 %v150, %v151
    %v153 = vmul.f32 %v152, %v152
    %v154 = vsel %vm143, 1, 0
    %v155 = vlaneseq
    %v156 = vshrl.u32 %v155, 7
    %v157 = vsub.s32 0, %v156
    %v158 = vrot.slane %v154, %v157
    %vm159 = vcmp.eq.s32.totalorder %v158, 1
    %v160 = vrot.slane %v44, 3
    %v162 = vsel %vm159, %v44, %v160
    %v164 = vrot.slane %v48, 4
    %v166 = vsub.f32 %v162, %v164
    %v167 = vmul.f32 %v166, %v166
    %v169 = vrot.slane %v167, 5
    %vm171 = vcmask 1041408
    %v172 = vsel %vm171, %v169, 0.0
    %v173 = vrot.slane %v172, 4
    %v174 = vadd.f32 %v172, %v173
    %v175 = vrot.slane %v174, 2
    %v176 = vadd.f32 %v174, %v175
    %v177 = vrot.slane %v176, 1
    %v178 = vadd.f32 %v176, %v177
    %v179 = vmul.f32 %v178, 5.0
    %v180 = vsel %vm159, %v45, %v160
    %v181 = vadd.f32 %v162, 1e-12
    %v182 = vadd.f32 %v180, 1e-12
    %v183 = vrsqrt.pop %v181
    %v184 = vmul.f32 %v181, %v183
    %vm185 = vcmp.eq.f32.partialorder %v181, inf
    %v186 = vsel %vm185, %v181, %v184
    %vm187 = vcmp.eq.f32.partialorder %v181, 0.0
    %v188 = vand.u32 %v181, 2147483648
    %v189 = vsel %vm187, %v188, %v186
    %v190 = vrsqrt.pop %v182
    %v191 = vmul.f32 %v182, %v190
    %vm192 = vcmp.eq.f32.partialorder %v182, inf
    %v193 = vsel %vm192, %v182, %v191
    %vm194 = vcmp.eq.f32.partialorder %v182, 0.0
    %v195 = vand.u32 %v182, 2147483648
    %v196 = vsel %vm194, %v195, %v193
    %v197 = vadd.f32 %v48, 1e-12
    %v198 = vrsqrt.pop %v197
    %v199 = vmul.f32 %v197, %v198
    %vm200 = vcmp.eq.f32.partialorder %v197, inf
    %v201 = vsel %vm200, %v197, %v199
    %vm202 = vcmp.eq.f32.partialorder %v197, 0.0
    %v203 = vand.u32 %v197, 2147483648
    %v204 = vsel %vm202, %v203, %v201
    %v206 = vrot.slane %v204, 4
    %v208 = vsub.f32 %v189, %v206
    %v209 = vsub.f32 %v196, %v206
    %v210 = vmul.f32 %v208, %v208
    %v211 = vmul.f32 %v209, %v209
    %vm214 = vcmask 1040384
    %v215 = vrot.slane %v210, 7
    %v216 = vrot.slane %v211, 7
    %v217 = vsel %vm214, %v215, %v216
    %v219 = vsel %vm171, %v217, 0.0
    %v220 = vrot.slane %v219, 4
    %v221 = vadd.f32 %v219, %v220
    %v222 = vrot.slane %v221, 2
    %v223 = vadd.f32 %v221, %v222
    %v224 = vrot.slane %v223, 1
    %v225 = vadd.f32 %v223, %v224
    %v226 = vmul.f32 %v225, 5.0
    %v227 = vcvt.f32.s32.to.zero.pseudo %v48
    %v228 = vsub.s32 %v227, 1
    %v229 = vlaneseq
    %v230 = vshrl.u32 %v229, 7
    %v231 = vadd.s32 %v230, 8
    %v232 = vadd.s32 %v230, 16
    %v233 = vlaneseq
    %v234 = vshrl.u32 %v233, 7
    %v235 = vsub.s32 0, %v234
    %v236 = vrot.slane %v228, %v235
    %vm237 = vcmp.eq.s32.totalorder %v230, %v236
    %vm238 = vcmp.eq.s32.totalorder %v231, %v236
    %vm239 = vcmp.eq.s32.totalorder %v232, %v236
    %v240 = vsel %vm237, 1, 0
    %v241 = vsel %vm238, 1, 0
    %v242 = vsel %vm239, 1, 0
    %v243 = vcvt.s32.f32 %v240
    %v244 = vcvt.s32.f32 %v241
    %v245 = vcvt.s32.f32 %v242
    %v249 = vrot.slane %v243, 6
    %v250 = vrot.slane %v244, 6
    %v251 = vsel %vm171, %v249, %v250
    %v252 = vrot.slane %v245, 6
    %v253 = vsel %vm171, %v250, %v252
    %v257 = vsub.f32 %v45, %v249
    %v258 = vsub.f32 %v46, %v251
    %v259 = vsub.f32 %v47, %v253
    %v260 = vmul.f32 %v257, %v257
    %v261 = vmul.f32 %v258, %v258
    %v262 = vmul.f32 %v259, %v259
    %vm266 = vcmask 1045504
    %v267 = vrot.slane %v260, 2
    %v268 = vrot.slane %v261, 2
    %v269 = vsel %vm266, %v267, %v268
    %v270 = vrot.slane %v262, 2
    %v271 = vsel %vm266, %v268, %v270
    %v275 = vadd.f32 %v269, %v271
    %vm276 = vcmask 1043456
    %v277 = vsel %vm276, %v270, 0.0
    %v278 = vadd.f32 %v275, %v277
    %v279 = vrot.slane %v278, 4
    %v280 = vadd.f32 %v278, %v279
    %v281 = vrot.slane %v280, 2
    %v282 = vadd.f32 %v280, %v281
    %v283 = vrot.slane %v282, 1
    %v284 = vadd.f32 %v282, %v283
    %v285 = vmul.f32 %v44, %v44
    %v286 = vmul.f32 %v45, %v45
    %v288 = vrot.slane %v286, 5
    %v290 = vadd.f32 %v285, %v288
    %v291 = vmul.f32 %v290, 0.5
    %v292 = vadd.f32 %v153, %v179
    %v293 = vadd.f32 %v292, %v226
    %v294 = vadd.f32 %v293, %v284
    %v296 = vrot.slane %v291, 4
    %v298 = vsel %vm49, %v294, %v296
    %v299 = vld [vmem:[#allocation2] sm:$0x1]
    %v300 = vsel %vm214, %v298, 0.0
    %301 = vadd.xlane.f32.xlu0 %v300
    %v302 = vpop.xlane.xlu0 %301
    %v303 = vrot.slane %v302, 4
    %v304 = vadd.f32 %v302, %v303
    %v305 = vrot.slane %v304, 2
    %v306 = vadd.f32 %v304, %v305
    %v307 = vrot.slane %v306, 1
    %v308 = vadd.f32 %v306, %v307
    %s309 = vtos %v308
    %v310 = vstv %s309
    %v311 = vadd.f32 %v299, %v310
    %vm312 = vcmask 0
    %313 = vst.msk [vmem:[#allocation2] sm:$0x1] %vm312, %v311
    // Predicated region
    $region22: #{tpu_custom_call.1} parent=1 // pred_check
      %p314 = pneg %p38
    $region23: #{tpu_custom_call.1} parent=1 // pred_check_branch
      %316 = sbr.rel (%p314) target = $region25
    $region24: #{tpu_custom_call.1} parent=1 // pred_region
      %v317 = vld [vmem:[#allocation2] sm:$0x1]
      %v318 = vrcp.pop 2.0
      %v319 = vmul.f32 %v317, %v318
      %320 = vst.msk [vmem:[#allocation8] sm:$0x1] %vm312, %v319
    $region25: #{tpu_custom_call.1} parent=1 // pred_fallthru
      _
    // Predicated region
    $region26: #{tpu_custom_call.1} parent=1 // pred_check
      _
    $region27: #{tpu_custom_call.1} parent=1 // pred_check_branch
      %322 = sbr.rel (0) target = $region29
    $region28: #{tpu_custom_call.1} parent=1 // pred_region
      %s324 = ssub.s32 16, 16
      %325 = vsyncadd [#allocation5], %s324
      %s327 = sshll.u32 [#allocation8], 4
      %s328 = int_to_ptr.vmem [resolvable:$true] %s327
      %330 = dma.vmem_to_hbm [thread:$0]  %s328, 16, %s2, [#allocation5]
    $region29: #{tpu_custom_call.1} parent=1 // pred_fallthru
      _
    // Predicated region
    $region30: #{tpu_custom_call.1} parent=1 // pred_check
      _
    $region31: #{tpu_custom_call.1} parent=1 // pred_check_branch
      %332 = sbr.rel (0) target = $region33
    $region32: #{tpu_custom_call.1} parent=1 // pred_region
      %333 = dma.done [#allocation5], 16
    $region33: #{tpu_custom_call.1} parent=1 // pred_fallthru
      _
    %334 = vsyncpa [#allocation4], 1
    %335 = vsyncpa [#allocation7], 1
    %336 = vsyncpa [#allocation5], 1

</llo_original>
